<compile_context>
chip_gen: v5e
topology: v5e:2x2
jax: 0.10.0
libtpu: 0.0.40
codegen_flags: <defaults>
</compile_context>

<pallas_src>
import functools

import jax
import jax.numpy as jnp
from jax.experimental import pallas as pl
from jax.experimental.pallas import tpu as pltpu


def fusion_att_kernel(x_ref, w_ref, b_ref, u_ref, mask_ref, out_ref, score_acc,
                      *, matmul_dtype):
    # x_ref:    (bt*S, H)   rows of the flattened (B*S, H) input (producer dtype)
    # w_ref:    (H, tn)     column slab of W (matmul_dtype)
    # b_ref:    (1, tn)
    # u_ref:    (1, tn)     u^T chunk as a row (VPU path, no N=1 matmul)
    # mask_ref: (bt, S)     1 = keep, 0 = masked
    # out_ref:  (bt, S)     lane-dense output (seq axis on lanes)
    # score_acc:(bt, S)     f32 VMEM accumulator across H-chunks
    bt, s = mask_ref.shape
    tn = w_ref.shape[-1]
    j = pl.program_id(1)

    @pl.when(j == 0)
    def _():
        score_acc[...] = jnp.zeros_like(score_acc)

    # One MXU matmul with M = bt*S, K = H, N = tn.  x is cast in-vreg so the
    # HBM->VMEM DMA stays at the producer dtype; accumulation is f32.
    xb = x_ref[...].astype(matmul_dtype)
    att = jnp.dot(xb, w_ref[...], preferred_element_type=jnp.float32)
    att = jnp.tanh(att + b_ref[...].astype(jnp.float32))          # (bt*S, tn) f32

    # Partial score for this H-chunk: att-slab @ u-chunk == VPU mul + lane reduce.
    prod = att * u_ref[...].astype(jnp.float32)                   # (bt*S, tn)
    score_acc[...] += jnp.sum(prod.reshape(bt, s, tn), axis=-1)   # (bt, S)

    @pl.when(j == pl.num_programs(1) - 1)
    def _():
        neg = jnp.finfo(jnp.float32).min
        score = jnp.where(mask_ref[...] > 0.0, score_acc[...], neg)  # single select
        mx = jnp.max(score, axis=-1, keepdims=True)                   # (bt, 1)
        e = jnp.exp(score - mx)
        denom = jnp.sum(e, axis=-1, keepdims=True)
        out_ref[...] = (e / denom).astype(out_ref.dtype)


def _pick_block_b(B, S, H, x_itemsize, target_bytes=6 << 20):
    """Batch elements folded into one grid step (matmul M = bt * S).

    bt must divide B and be a multiple of 8 (or equal B) so the (bt, S)
    mask / output blocks satisfy the (8, 128) tiling rule.  The cap is
    byte-driven (~6 MiB x block) so the double-buffered pipeline stays well
    inside the 32 MiB VMEM budget on every generation, and we keep at least
    two grid steps along the parallel axis when B allows (v7x megacore).
    """
    row_bytes = max(1, S * H * x_itemsize)
    cap = max(1, target_bytes // row_bytes)
    best = 0
    bt = 8
    while bt <= min(B, cap):
        if B % bt == 0:
            best = bt
        bt += 8
    if best == 0:
        return B           # small / awkward B: whole batch in one step
    if B // best < 2:      # best == B: split so both v7x TensorCores get work
        smaller = best - 8
        while smaller >= 8:
            if B % smaller == 0:
                return smaller
            smaller -= 8
    return best


def _pick_tile_n(H, w_itemsize, target_bytes=2 << 20):
    """Output-column tile of W: a multiple of 128 dividing H (or H itself)."""
    if H % 128 != 0:
        return H
    best = 128
    tn = 128
    while tn <= H:
        if H % tn == 0 and H * tn * w_itemsize <= target_bytes:
            best = tn
        tn += 128
    return best


def fusion_att(x, W, b, u, mask, *, matmul_dtype=jnp.bfloat16):
    """x: [B, S, H], W: [H, H], b: [H], u: [H, 1], mask: [B, S] -> [B, S]."""
    B, S, H = x.shape

    x2 = x.reshape(B * S, H)                       # fold batch into M; NO dtype cast
    Wc = W.astype(matmul_dtype)                    # halves W DMA/VMEM when bf16
    b2 = b.reshape(1, H).astype(jnp.float32)
    u2 = u.reshape(1, H).astype(jnp.float32)       # u^T row for the VPU path
    mask2 = mask.astype(jnp.float32)               # (B, S)

    bt = _pick_block_b(B, S, H, x2.dtype.itemsize)
    tn = _pick_tile_n(H, Wc.dtype.itemsize)
    grid = (B // bt, H // tn)                      # (parallel, arbitrary)

    cost = pl.CostEstimate(
        flops=2 * B * S * H * H + 2 * B * S * H,
        transcendentals=B * S * H + B * S,
        bytes_accessed=(x2.size * x2.dtype.itemsize
                        + Wc.size * Wc.dtype.itemsize
                        + (b2.size + u2.size + mask2.size + B * S) * 4),
    )

    kernel = functools.partial(fusion_att_kernel, matmul_dtype=matmul_dtype)

    out = pl.pallas_call(
        kernel,
        out_shape=jax.ShapeDtypeStruct((B, S), jnp.float32),
        grid_spec=pltpu.PrefetchScalarGridSpec(
            num_scalar_prefetch=0,
            grid=grid,
            in_specs=[
                pl.BlockSpec((bt * S, H), lambda i, j: (i, 0)),   # x rows (full K)
                pl.BlockSpec((H, tn), lambda i, j: (0, j)),       # W column slab
                pl.BlockSpec((1, tn), lambda i, j: (0, j)),       # b chunk
                pl.BlockSpec((1, tn), lambda i, j: (0, j)),       # u^T chunk
                pl.BlockSpec((bt, S), lambda i, j: (i, 0)),       # mask
            ],
            out_specs=pl.BlockSpec((bt, S), lambda i, j: (i, 0)),
            scratch_shapes=[pltpu.VMEM((bt, S), jnp.float32)],    # score accumulator
        ),
        compiler_params=pltpu.CompilerParams(
            dimension_semantics=("parallel", "arbitrary"),
            vmem_limit_bytes=32 << 20,
        ),
        cost_estimate=cost,
    )(x2, Wc, b2, u2, mask2)
    return out


def xavier_uniform(key, shape):
    fan_out, fan_in = shape[0], shape[1]
    bound = (6.0 / (fan_in + fan_out)) ** 0.5
    return jax.random.uniform(key, shape, jnp.float32, -bound, bound)


if __name__ == "__main__":
    B, S, H = 2, 8, 32  # batch, seq, hid_dim

    key = jax.random.PRNGKey(0)
    kx, kw, ku, km = jax.random.split(key, 4)

    x = jax.random.normal(kx, (B, S, H), jnp.float32)
    W = xavier_uniform(kw, (H, H))
    b = jnp.zeros((H,), jnp.float32)
    u = xavier_uniform(ku, (H, 1))
    # binary mask; guarantee at least one unmasked position per row so the
    # softmax is well-defined (matches the reference formula exactly).
    mask = (jax.random.uniform(km, (B, S)) > 0.3).astype(jnp.float32)
    mask = mask.at[:, 0].set(1.0)

    # plain-JAX reference (PyTorch formula)
    ref_att = jnp.tanh(x @ W + b[None, None, :])
    ref_s = (ref_att @ u)[:, :, 0]
    ref_s = ref_s + (1.0 - mask) * jnp.finfo(jnp.float32).min
    ref = jax.nn.softmax(ref_s, axis=-1)

    # exact-parity path (f32 matmul)
    out_f32 = fusion_att(x, W, b, u, mask, matmul_dtype=jnp.float32)
    jax.block_until_ready(out_f32)
    assert jnp.allclose(out_f32, ref, atol=1e-5, rtol=1e-5), (out_f32, ref)

    # default fast path (bf16 MXU matmul, f32 accumulation) — accuracy opt-out
    out_bf16 = fusion_att(x, W, b, u, mask)
    jax.block_until_ready(out_bf16)
    assert jnp.allclose(out_bf16, ref, atol=2e-2, rtol=2e-2), (out_bf16, ref)

    print("KERNEL_OK")
</pallas_src>

<mosaic_0001>
module attributes {stable_mosaic.version = 11 : i64} {
  func.func @fusion_att_kernel(%arg0: i32, %arg1: i32, %arg2: memref<16x32xf32, #tpu.memory_space<vmem>>, %arg3: memref<32x32xf32, #tpu.memory_space<vmem>>, %arg4: memref<1x32xf32, #tpu.memory_space<vmem>>, %arg5: memref<1x32xf32, #tpu.memory_space<vmem>>, %arg6: memref<2x8xf32, #tpu.memory_space<vmem>>, %arg7: memref<2x8xf32, #tpu.memory_space<vmem>>, %arg8: memref<2x8xf32, #tpu.memory_space<vmem>>) attributes {dimension_semantics = [#tpu.dimension_semantics<parallel>, #tpu.dimension_semantics<arbitrary>], iteration_bounds = array<i64: 1, 1>, scalar_prefetch = 0 : i64, scratch_operands = 1 : i64, tpu.core_type = #tpu.core_type<tc>, window_params = [{transform_indices = @transform_0, window_bounds = array<i64: 16, 32>}, {transform_indices = @transform_1, window_bounds = array<i64: 32, 32>}, {transform_indices = @transform_2, window_bounds = array<i64: 1, 32>}, {transform_indices = @transform_3, window_bounds = array<i64: 1, 32>}, {transform_indices = @transform_4, window_bounds = array<i64: 2, 8>}, {transform_indices = @transform_5, window_bounds = array<i64: 2, 8>}]} {
    %c0_i32 = arith.constant 0 : i32
    %0 = arith.cmpi eq, %arg1, %c0_i32 : i32
    %1 = arith.extui %0 : i1 to i32
    %c0_i32_0 = arith.constant 0 : i32
    %2 = arith.cmpi ne, %1, %c0_i32_0 : i32
    scf.if %2 {
      %cst_15 = arith.constant 0.000000e+00 : f32
      %21 = vector.broadcast %cst_15 : f32 to vector<2x8xf32>
      %c0_16 = arith.constant 0 : index
      %c0_17 = arith.constant 0 : index
      %22 = vector.load %arg8[%c0_16, %c0_17] : memref<2x8xf32, #tpu.memory_space<vmem>>, vector<2x8xf32>
      tpu.vector_store %arg8[%c0_16, %c0_17], %21 {strides = array<i32>} : memref<2x8xf32, #tpu.memory_space<vmem>>, vector<2x8xf32>,
    } else {
    }
    %c0 = arith.constant 0 : index
    %c0_1 = arith.constant 0 : index
    %3 = vector.load %arg2[%c0, %c0_1] : memref<16x32xf32, #tpu.memory_space<vmem>>, vector<16x32xf32>
    %c0_2 = arith.constant 0 : index
    %c0_3 = arith.constant 0 : index
    %4 = vector.load %arg3[%c0_2, %c0_3] : memref<32x32xf32, #tpu.memory_space<vmem>>, vector<32x32xf32>
    %cst = arith.constant dense<0.000000e+00> : vector<16x32xf32>
    %5 = tpu.matmul %3, %4, %cst {dimension_numbers = #tpu.dot_dimension_numbers<[1], [0], [0], [1], [0, 0, 1, 1], [], []>} : vector<16x32xf32>, vector<32x32xf32>, vector<16x32xf32> -> vector<16x32xf32>
    %c0_4 = arith.constant 0 : index
    %c0_5 = arith.constant 0 : index
    %6 = vector.load %arg4[%c0_4, %c0_5] : memref<1x32xf32, #tpu.memory_space<vmem>>, vector<1x32xf32>
    %7 = vector.broadcast %6 : vector<1x32xf32> to vector<16x32xf32>
    %8 = arith.addf %5, %7 : vector<16x32xf32>
    %9 = math.tanh %8 : vector<16x32xf32>
    %c0_6 = arith.constant 0 : index
    %c0_7 = arith.constant 0 : index
    %10 = vector.load %arg5[%c0_6, %c0_7] : memref<1x32xf32, #tpu.memory_space<vmem>>, vector<1x32xf32>
    %11 = vector.broadcast %10 : vector<1x32xf32> to vector<16x32xf32>
    %12 = arith.mulf %9, %11 : vector<16x32xf32>
    %c0_8 = arith.constant 0 : index
    %c0_9 = arith.constant 0 : index
    %13 = vector.load %arg8[%c0_8, %c0_9] : memref<2x8xf32, #tpu.memory_space<vmem>>, vector<2x8xf32>
    %14 = vector.shape_cast %12 : vector<16x32xf32> to vector<2x8x32xf32>
    %cst_10 = arith.constant dense<0.000000e+00> : vector<2x8xf32>
    %15 = vector.multi_reduction <add>, %14, %cst_10 [2] : vector<2x8x32xf32> to vector<2x8xf32>
    %16 = arith.addf %13, %15 : vector<2x8xf32>
    %c0_11 = arith.constant 0 : index
    %c0_12 = arith.constant 0 : index
    %17 = vector.load %arg8[%c0_11, %c0_12] : memref<2x8xf32, #tpu.memory_space<vmem>>, vector<2x8xf32>
    tpu.vector_store %arg8[%c0_11, %c0_12], %16 {strides = array<i32>} : memref<2x8xf32, #tpu.memory_space<vmem>>, vector<2x8xf32>,
    %c0_i32_13 = arith.constant 0 : i32
    %18 = arith.cmpi eq, %arg1, %c0_i32_13 : i32
    %19 = arith.extui %18 : i1 to i32
    %c0_i32_14 = arith.constant 0 : i32
    %20 = arith.cmpi ne, %19, %c0_i32_14 : i32
    scf.if %20 {
      %c0_15 = arith.constant 0 : index
      %c0_16 = arith.constant 0 : index
      %21 = vector.load %arg6[%c0_15, %c0_16] : memref<2x8xf32, #tpu.memory_space<vmem>>, vector<2x8xf32>
      %cst_17 = arith.constant 0.000000e+00 : f32
      %22 = vector.broadcast %cst_17 : f32 to vector<2x8xf32>
      %23 = arith.cmpf ogt, %21, %22 : vector<2x8xf32>
      %c0_18 = arith.constant 0 : index
      %c0_19 = arith.constant 0 : index
      %24 = vector.load %arg8[%c0_18, %c0_19] : memref<2x8xf32, #tpu.memory_space<vmem>>, vector<2x8xf32>
      %cst_20 = arith.constant -3.40282347E+38 : f32
      %25 = vector.broadcast %cst_20 : f32 to vector<2x8xf32>
      %26 = arith.select %23, %24, %25 : vector<2x8xi1>, vector<2x8xf32>
      %cst_21 = arith.constant dense<0xFF800000> : vector<2xf32>
      %27 = vector.multi_reduction <maximumf>, %26, %cst_21 [1] : vector<2x8xf32> to vector<2xf32>
      %28 = vector.shape_cast %27 : vector<2xf32> to vector<2x1xf32>
      %29 = vector.broadcast %28 : vector<2x1xf32> to vector<2x8xf32>
      %30 = arith.subf %26, %29 : vector<2x8xf32>
      %31 = math.exp %30 : vector<2x8xf32>
      %cst_22 = arith.constant dense<0.000000e+00> : vector<2xf32>
      %32 = vector.multi_reduction <add>, %31, %cst_22 [1] : vector<2x8xf32> to vector<2xf32>
      %33 = vector.shape_cast %32 : vector<2xf32> to vector<2x1xf32>
      %34 = vector.broadcast %33 : vector<2x1xf32> to vector<2x8xf32>
      %35 = arith.divf %31, %34 : vector<2x8xf32>
      %c0_23 = arith.constant 0 : index
      %c0_24 = arith.constant 0 : index
      %36 = vector.load %arg7[%c0_23, %c0_24] : memref<2x8xf32, #tpu.memory_space<vmem>>, vector<2x8xf32>
      tpu.vector_store %arg7[%c0_23, %c0_24], %35 {strides = array<i32>} : memref<2x8xf32, #tpu.memory_space<vmem>>, vector<2x8xf32>,
    } else {
    }
    return
  }
  func.func @transform_0(%arg0: i32, %arg1: i32) -> (i32, i32) {
    %c0_i32 = arith.constant 0 : i32
    %c0_i32_0 = arith.constant 0 : i32
    return %arg0, %c0_i32 : i32, i32
  }
  func.func @transform_1(%arg0: i32, %arg1: i32) -> (i32, i32) {
    %c0_i32 = arith.constant 0 : i32
    %c0_i32_0 = arith.constant 0 : i32
    return %c0_i32, %arg1 : i32, i32
  }
  func.func @transform_2(%arg0: i32, %arg1: i32) -> (i32, i32) {
    %c0_i32 = arith.constant 0 : i32
    %c0_i32_0 = arith.constant 0 : i32
    return %c0_i32, %arg1 : i32, i32
  }
  func.func @transform_3(%arg0: i32, %arg1: i32) -> (i32, i32) {
    %c0_i32 = arith.constant 0 : i32
    %c0_i32_0 = arith.constant 0 : i32
    return %c0_i32, %arg1 : i32, i32
  }
  func.func @transform_4(%arg0: i32, %arg1: i32) -> (i32, i32) {
    %c0_i32 = arith.constant 0 : i32
    %c0_i32_0 = arith.constant 0 : i32
    return %arg0, %c0_i32 : i32, i32
  }
  func.func @transform_5(%arg0: i32, %arg1: i32) -> (i32, i32) {
    %c0_i32 = arith.constant 0 : i32
    %c0_i32_0 = arith.constant 0 : i32
    return %arg0, %c0_i32 : i32, i32
  }
}

</mosaic_0001>

<llo_original>
// kernel: tpu_custom_call.1
$region0: #{tpu_custom_call.1}
  #allocation0 [shape = 'u32[]', space=smem, size = 0x4, offset = 0x4, fixed_abs, tag = 'smem constant byte address 0x4 - core index']
  #allocation1 [shape = 'u32[72,128]{1,0:T(1,128)}', space=vmem, size = 0x9000, scoped, tag = 'internal scratch']
  #allocation2 [shape = 'f32[2,8]{1,0:T(2,128)}', space=vmem, size = 0x400, scoped, tag = 'scratch operand']
  %s0 = inlined_call_operand.hbm [shape: f32[16,32], index: 0, kind: input, shape index: {}]
  %s1 = inlined_call_operand.hbm [shape: f32[32,32], index: 1, kind: input, shape index: {}]
  %s2 = inlined_call_operand.vmem [shape: f32[1,32], index: 2, kind: input, shape index: {}]
  %s3 = inlined_call_operand.hbm [shape: f32[1,32], index: 3, kind: input, shape index: {}]
  %s4 = inlined_call_operand.vmem [shape: f32[2,8], index: 4, kind: input, shape index: {}]
  %s5 = inlined_call_operand.hbm [shape: f32[2,8], index: 5, kind: output, shape index: {}]
  %s6 = sld [smem:[#allocation0]]
  $region50: #{tpu_custom_call.1} parent=0
    _
  %s8 = ssub.s32 1, %s6
  %s9 = scalar_select 0, %s8, %s6
  $region1: #{tpu_custom_call.1} parent=0
    #allocation3 [shape = 'u8[8192]{0}', space=vmem, size = 0x2000, scoped, tag = 'input window, operand 0, single buffered']
    #allocation4 [shape = 's32[1]{0}', space=sflag, size = 0x4, scoped, tag = 'scoped memory for tpu_custom_call.1']
    #allocation5 [shape = 's32[1]{0}', space=sflag, size = 0x4, scoped, tag = 'scoped memory for tpu_custom_call.1']
    #allocation6 [shape = 'u8[16384]{0}', space=vmem, size = 0x4000, scoped, tag = 'input window, operand 1, single buffered']
    #allocation7 [shape = 's32[1]{0}', space=sflag, size = 0x4, scoped, tag = 'scoped memory for tpu_custom_call.1']
    #allocation8 [shape = 'u8[512]{0}', space=vmem, size = 0x400, scoped, tag = 'input window, operand 3, single buffered']
    #allocation9 [shape = 'u8[1024]{0}', space=vmem, size = 0x400, scoped, tag = 'output window, operand 0, single buffered']
    %10 = vsyncpa [#allocation4], 0
    %11 = vsyncpa [#allocation7], 0
    %12 = vsyncpa [#allocation5], 0
    // Predicated region
    $region2: #{tpu_custom_call.1} parent=1 // pred_check
      _
    $region3: #{tpu_custom_call.1} parent=1 // pred_check_branch
      %14 = sbr.rel (0) target = $region5
    $region4: #{tpu_custom_call.1} parent=1 // pred_region
      %16 = vsyncadd [#allocation4], 0
      %s17 = sshll.u32 %s0, 4
      %s18 = int_to_ptr.hbm [resolvable:$true] %s17
      %s19 = sshll.u32 [#allocation3], 4
      %s20 = int_to_ptr.vmem [resolvable:$true] %s19
      %25 = dma.hbm_to_vmem [thread:$0]  %s18, 256, %s20, [#allocation4], 128, 128, 8
    $region5: #{tpu_custom_call.1} parent=1 // pred_fallthru
      _
    // Predicated region
    $region6: #{tpu_custom_call.1} parent=1 // pred_check
      _
    $region7: #{tpu_custom_call.1} parent=1 // pred_check_branch
      %27 = sbr.rel (0) target = $region9
    $region8: #{tpu_custom_call.1} parent=1 // pred_region
      %29 = vsyncadd [#allocation7], 0
      %s30 = sshll.u32 %s1, 4
      %s31 = int_to_ptr.hbm [resolvable:$true] %s30
      %s32 = sshll.u32 [#allocation6], 4
      %s33 = int_to_ptr.vmem [resolvable:$true] %s32
      %38 = dma.hbm_to_vmem [thread:$0]  %s31, 512, %s33, [#allocation7], 128, 128, 8
    $region9: #{tpu_custom_call.1} parent=1 // pred_fallthru
      _
    // Predicated region
    $region10: #{tpu_custom_call.1} parent=1 // pred_check
      _
    $region11: #{tpu_custom_call.1} parent=1 // pred_check_branch
      %40 = sbr.rel (0) target = $region13
    $region12: #{tpu_custom_call.1} parent=1 // pred_region
      _
    $region13: #{tpu_custom_call.1} parent=1 // pred_fallthru
      _
    // Predicated region
    $region14: #{tpu_custom_call.1} parent=1 // pred_check
      _
    $region15: #{tpu_custom_call.1} parent=1 // pred_check_branch
      %42 = sbr.rel (0) target = $region17
    $region16: #{tpu_custom_call.1} parent=1 // pred_region
      %44 = vsyncadd [#allocation7], 0
      %s46 = sshll.u32 %s3, 4
      %s47 = int_to_ptr.hbm [resolvable:$true] %s46
      %s48 = sshll.u32 [#allocation8], 4
      %s49 = int_to_ptr.vmem [resolvable:$true] %s48
      %51 = dma.hbm_to_vmem [thread:$0]  %s47, 16, %s49, [#allocation7]
    $region17: #{tpu_custom_call.1} parent=1 // pred_fallthru
      _
    // Predicated region
    $region18: #{tpu_custom_call.1} parent=1 // pred_check
      _
    $region19: #{tpu_custom_call.1} parent=1 // pred_check_branch
      %53 = sbr.rel (0) target = $region21
    $region20: #{tpu_custom_call.1} parent=1 // pred_region
      _
    $region21: #{tpu_custom_call.1} parent=1 // pred_fallthru
      _
    // Predicated region
    $region22: #{tpu_custom_call.1} parent=1 // pred_check
      _
    $region23: #{tpu_custom_call.1} parent=1 // pred_check_branch
      %55 = sbr.rel (0) target = $region25
    $region24: #{tpu_custom_call.1} parent=1 // pred_region
      %57 = dma.done [#allocation4], 256
    $region25: #{tpu_custom_call.1} parent=1 // pred_fallthru
      _
    // Predicated region
    $region26: #{tpu_custom_call.1} parent=1 // pred_check
      _
    $region27: #{tpu_custom_call.1} parent=1 // pred_check_branch
      %59 = sbr.rel (0) target = $region29
    $region28: #{tpu_custom_call.1} parent=1 // pred_region
      %61 = dma.done [#allocation7], 512
    $region29: #{tpu_custom_call.1} parent=1 // pred_fallthru
      _
    // Predicated region
    $region30: #{tpu_custom_call.1} parent=1 // pred_check
      _
    $region31: #{tpu_custom_call.1} parent=1 // pred_check_branch
      %63 = sbr.rel (0) target = $region33
    $region32: #{tpu_custom_call.1} parent=1 // pred_region
      %65 = dma.done [#allocation7], 16
    $region33: #{tpu_custom_call.1} parent=1 // pred_fallthru
      _
    %p66 = scmp.eq.s32.totalorder 0, 0
    // Predicated region
    $region34: #{tpu_custom_call.1} parent=1 // pred_check
      %p67 = pneg %p66
    $region35: #{tpu_custom_call.1} parent=1 // pred_check_branch
      %69 = sbr.rel (%p67) target = $region37
    $region36: #{tpu_custom_call.1} parent=1 // pred_region
      %vm70 = vcmask 58368
      %71 = vst.msk [vmem:[#allocation2] sm:$0x3] %vm70, 0.0
    $region37: #{tpu_custom_call.1} parent=1 // pred_fallthru
      _
    %v72 = vld [vmem:[#allocation3] sm:$0xff]
    %v73 = vld [vmem:[#allocation3 + $0x8] sm:$0xff]
    %v74 = vld [vmem:[#allocation6] sm:$0xff]
    %v75 = vld [vmem:[#allocation6 + $0x8] sm:$0xff]
    %v76 = vld [vmem:[#allocation6 + $0x10] sm:$0xff]
    %v77 = vld [vmem:[#allocation6 + $0x18] sm:$0xff]
    %v78 = vld [vmem:[%s2] sm:$0x1]
    %v80 = vperm.slane %v78, 0
    %vm82 = vcmask 261120
    %v84 = vsel %vm82, %v72, 0
    %v87 = vsel %vm82, %v73, 0
    %89 = vmatpush.msra.mxu0 0.0
    %90 = vmatpush.msra.mxu0 0.0
    %91 = vmatpush.msra.mxu0 0.0
    %92 = vmatpush.msra.mxu0 0.0
    %93 = vmatpush.msra.mxu0 0.0
    %94 = vmatpush.msra.mxu0 0.0
    %95 = vmatpush.msra.mxu0 0.0
    %96 = vmatpush.msra.mxu0 0.0
    %97 = vmatpush.msra.mxu0 0.0
    %98 = vmatpush.msra.mxu0 0.0
    %99 = vmatpush.msra.mxu0 0.0
    %100 = vmatpush.msra.mxu0 0.0
    %101 = vmatpush.msra.mxu0 %v77
    %102 = vmatpush.msra.mxu0 %v76
    %103 = vmatpush.msra.mxu0 %v75
    %104 = vmatpush.msra.mxu0 %v74
    %105 = vmatmul.f32.gmra.mxu0 %v84
    %v106 = vpop.f32.mrf.mxu0
    %v107 = vadd.f32 %v80, %v106
    %108 = vmatmul.f32.gmra.mxu0 %v87
    %v109 = vpop.f32.mrf.mxu0
    %v110 = vadd.f32 %v80, %v109
    %111 = vdwg.mxu0
    %v112 = vtanh.pop %v107
    %v113 = vtanh.pop %v110
    %v114 = vld [vmem:[#allocation8] sm:$0x1]
    %v116 = vperm.slane %v114, 0
    %v118 = vmul.f32 %v112, %v116
    %v119 = vmul.f32 %v113, %v116
    %v120 = vld [vmem:[#allocation2] sm:$0x3]
    %v121 = vsel %vm82, %v118, 0.0
    %122 = vadd.xlane.f32.xlu0 %v121
    %v123 = vpop.xlane.xlu0 %122
    %v124 = vsel %vm82, %v119, 0.0
    %125 = vadd.xlane.f32.xlu0 %v124
    %v126 = vpop.xlane.xlu0 %125
    %v129 = vlaneseq
    %v130 = vand.u32 %v129, 127
    %v131 = vperm.slane %v123, %v130
    %v132 = vperm.slane %v126, %v130
    %vm133 = vcmask 1041409
    %v134 = vsel %vm133, %v132, %v131
    %v136 = vadd.f32 %v120, %v134
    %vm137 = vcmask 58368
    %138 = vst.msk [vmem:[#allocation2] sm:$0x3] %vm137, %v136
    // Predicated region
    $region38: #{tpu_custom_call.1} parent=1 // pred_check
      %p139 = pneg %p66
    $region39: #{tpu_custom_call.1} parent=1 // pred_check_branch
      %141 = sbr.rel (%p139) target = $region41
    $region40: #{tpu_custom_call.1} parent=1 // pred_region
      %v142 = vld [vmem:[%s4] sm:$0x3]
      %vm143 = vcmp.gt.f32.partialorder %v142, 0.0
      %v144 = vld [vmem:[#allocation2] sm:$0x3]
      %v145 = vsel %vm143, %v144, -3.4028235e+38
      %v146 = vsel %vm137, %v145, -inf
      %147 = vmax.xlane.f32.xlu0 %v146
      %v148 = vpop.xlane.xlu0 %147
      %v149 = vsub.f32 %v145, %v148
      %v150 = vmul.f32 %v149, 1.442695
      %v151 = vpow.pop %v150
      %v152 = vsel %vm137, %v151, 0.0
      %153 = vadd.xlane.f32.xlu0 %v152
      %v154 = vpop.xlane.xlu0 %153
      %v155 = vrcp.pop %v154
      %v156 = vmul.f32 %v154, %v155
      %v157 = vsub.f32 1.0, %v156
      %v158 = vmul.f32 %v155, %v157
      %v159 = vadd.f32 %v155, %v158
      %vm160 = vweird.f32 %v154
      %vm161 = vweird.f32 %v155
      %vm162 = vmor %vm160, %vm161
      %v163 = vsel %vm162, %v155, %v159
      %v164 = vand.u32 2147483647, %v154
      %vm165 = vcmp.eq.f32.partialorder %v164, 8.507059e+37
      %v166 = vand.u32 %v154, 2147483648
      %v167 = vor.u32 1.1754944e-38, %v166
      %v168 = vsel %vm165, %v167, %v163
      %v169 = vmul.f32 %v151, %v168
      %170 = vst.msk [vmem:[#allocation9] sm:$0x3] %vm137, %v169
    $region41: #{tpu_custom_call.1} parent=1 // pred_fallthru
      _
    // Predicated region
    $region42: #{tpu_custom_call.1} parent=1 // pred_check
      _
    $region43: #{tpu_custom_call.1} parent=1 // pred_check_branch
      %172 = sbr.rel (0) target = $region45
    $region44: #{tpu_custom_call.1} parent=1 // pred_region
      %174 = vsyncadd [#allocation5], 0
      %s176 = sshll.u32 [#allocation9], 4
      %s177 = int_to_ptr.vmem [resolvable:$true] %s176
      %s178 = sshll.u32 %s5, 4
      %s179 = int_to_ptr.hbm [resolvable:$true] %s178
      %181 = dma.vmem_to_hbm [thread:$0]  %s177, 32, %s179, [#allocation5]
    $region45: #{tpu_custom_call.1} parent=1 // pred_fallthru
      _
    // Predicated region
    $region46: #{tpu_custom_call.1} parent=1 // pred_check
      _
    $region47: #{tpu_custom_call.1} parent=1 // pred_check_branch
      %183 = sbr.rel (0) target = $region49
    $region48: #{tpu_custom_call.1} parent=1 // pred_region
      %185 = dma.done [#allocation5], 32
    $region49: #{tpu_custom_call.1} parent=1 // pred_fallthru
      _
    %186 = vsyncpa [#allocation4], 1
    %187 = vsyncpa [#allocation7], 1
    %188 = vsyncpa [#allocation5], 1

</llo_original>
